<compile_context>
chip_gen: v7x
topology: tpu7x:2x2x1
jax: 0.10.0
libtpu: 0.0.40
codegen_flags: <defaults>
</compile_context>

<pallas_src>
import math

import jax
import jax.numpy as jnp
from jax.experimental import pallas as pl
from jax.experimental.pallas import tpu as pltpu

d_k = d_v = 4


def _make_kernel(dk, dv, scale, approx_reciprocal):
    """Kernel over one lane-dense batch tile.

    Ref shapes (TB = batch tile, batch lives on the lane axis):
      q_ref:    (dk, Sq, TB)
      k_ref:    (dk, Sk, TB)
      v_ref:    (dv, Sk, TB)
      ctx_ref:  (Sq, dv, TB)
      attn_ref: (Sq, Sk, TB)
    """

    def kernel(q_ref, k_ref, v_ref, ctx_ref, attn_ref):
        # Compute in fp32 (no-op for fp32 inputs, correct for bf16 inputs).
        q = q_ref[...].astype(jnp.float32)
        k = k_ref[...].astype(jnp.float32)
        v = v_ref[...].astype(jnp.float32)

        # scores[qi, ki, b] = sum_d q[d, qi, b] * k[d, ki, b]
        # dk is tiny (4): unrolled VPU broadcast-multiply-adds over the
        # lane-resident batch axis -- no transposes, no underutilized MXU.
        scores = q[0, :, None, :] * k[0, None, :, :]
        for d in range(1, dk):
            scores = scores + q[d, :, None, :] * k[d, None, :, :]
        scores = scores * scale                          # (Sq, Sk, TB)

        # Numerically stable softmax over the Sk (sublane) axis.
        m = jnp.max(scores, axis=1, keepdims=True)       # (Sq, 1, TB)
        e = jnp.exp(scores - m)
        denom = jnp.sum(e, axis=1, keepdims=True)        # (Sq, 1, TB)
        inv = pl.reciprocal(denom, approx=approx_reciprocal)
        attn = e * inv                                   # (Sq, Sk, TB)
        attn_ref[...] = attn.astype(attn_ref.dtype)

        # context[qi, dvi, b] = sum_k attn[qi, k, b] * v[dvi, k, b]
        cols = []
        for dvi in range(dv):
            cols.append(jnp.sum(attn * v[dvi, None, :, :], axis=1))  # (Sq, TB)
        ctx = jnp.stack(cols, axis=1)                    # (Sq, dv, TB)
        ctx_ref[...] = ctx.astype(ctx_ref.dtype)

    return kernel


def _pick_batch_tile(B, dk, dv, Sq, Sk, itemsize=4,
                     vmem_budget_bytes=8 * 1024 * 1024):
    """Largest 128-multiple batch tile that divides B and fits the VMEM budget.

    The budget is conservative (~8 MiB of double-buffered block data) so the
    same tiling fits v5e/v6e (128 MiB VMEM) and v7x (64 MiB VMEM) easily.
    """
    # Bytes of block data per batch lane, x2 for the pipeline's double buffers.
    per_lane = 2 * itemsize * (dk * Sq + dk * Sk + dv * Sk + Sq * dv + Sq * Sk)
    max_tb = max(128, (vmem_budget_bytes // per_lane) // 128 * 128)
    if B % 128 == 0:
        tb = min(B, max_tb)
        while B % tb != 0:
            tb -= 128
        return tb
    # Small / odd batch: one lane-dense block covering the whole batch.
    return B


def scaled_dot_product_attention(Q, K, V, d_k_val, *, batch_tile=None,
                                 attn_dtype=jnp.float32,
                                 approx_reciprocal=True):
    """Q: [B, d_k, Sq], K: [B, d_k, Sk], V: [B, d_v, Sk]
       -> (context [B, Sq, d_v] fp32, attn [B, Sq, Sk] attn_dtype)."""
    B, dk, Sq = Q.shape
    _, _, Sk = K.shape
    dv = V.shape[1]
    scale = 1.0 / math.sqrt(d_k_val)

    # Lane-dense layout: put batch on the minormost (lane) axis.  This is
    # pure layout plumbing in the wrapper; it makes every in-kernel vreg and
    # every output store lane-dense once the batch tile is a 128-multiple.
    Qp = jnp.transpose(Q, (1, 2, 0))   # (dk, Sq, B)
    Kp = jnp.transpose(K, (1, 2, 0))   # (dk, Sk, B)
    Vp = jnp.transpose(V, (1, 2, 0))   # (dv, Sk, B)

    TB = _pick_batch_tile(B, dk, dv, Sq, Sk) if batch_tile is None else batch_tile
    assert B % TB == 0, "batch tile must divide the batch"
    assert TB == B or TB % 128 == 0, "batch tile must be lane-aligned (128) or the full batch"
    grid = (B // TB,)

    kernel = _make_kernel(dk, dv, scale, approx_reciprocal)

    out_shape = (
        jax.ShapeDtypeStruct((Sq, dv, B), jnp.float32),   # context (lane-dense)
        jax.ShapeDtypeStruct((Sq, Sk, B), attn_dtype),    # attn    (lane-dense)
    )

    grid_spec = pltpu.PrefetchScalarGridSpec(
        num_scalar_prefetch=0,
        grid=grid,
        in_specs=[
            pl.BlockSpec((dk, Sq, TB), lambda b: (0, 0, b)),
            pl.BlockSpec((dk, Sk, TB), lambda b: (0, 0, b)),
            pl.BlockSpec((dv, Sk, TB), lambda b: (0, 0, b)),
        ],
        out_specs=(
            pl.BlockSpec((Sq, dv, TB), lambda b: (0, 0, b)),
            pl.BlockSpec((Sq, Sk, TB), lambda b: (0, 0, b)),
        ),
    )

    ctx_p, attn_p = pl.pallas_call(
        kernel,
        out_shape=out_shape,
        grid_spec=grid_spec,
        compiler_params=pltpu.CompilerParams(
            # Batch tiles are independent -> megacore / v7x's two TensorCores
            # can split the grid axis.
            dimension_semantics=("parallel",),
        ),
    )(Qp, Kp, Vp)

    context = jnp.transpose(ctx_p, (2, 0, 1))   # (B, Sq, dv)
    attn = jnp.transpose(attn_p, (2, 0, 1))     # (B, Sq, Sk)
    return context, attn


def _reference(Q, K, V, d_k_val):
    scores = jnp.einsum("bdq,bdk->bqk", Q, K) / math.sqrt(d_k_val)
    attn = jax.nn.softmax(scores, axis=-1)
    context = jnp.einsum("bqk,bvk->bqv", attn, V)
    return context, attn


if __name__ == "__main__":
    # Case 1: the module's own tiny shapes (batch=2).  Exact-reciprocal path,
    # checked at tight fp32 tolerance.
    key = jax.random.PRNGKey(0)
    kq, kk, kv = jax.random.split(key, 3)
    B, Sq, Sk = 2, 8, 8
    Q = jax.random.normal(kq, (B, d_k, Sq), dtype=jnp.float32)
    K = jax.random.normal(kk, (B, d_k, Sk), dtype=jnp.float32)
    V = jax.random.normal(kv, (B, d_v, Sk), dtype=jnp.float32)

    context, attn = scaled_dot_product_attention(Q, K, V, d_k,
                                                 approx_reciprocal=False)
    jax.block_until_ready((context, attn))
    ctx_ref, attn_ref = _reference(Q, K, V, d_k)
    assert context.shape == (B, Sq, d_v)
    assert attn.shape == (B, Sq, Sk)
    assert jnp.allclose(context, ctx_ref, atol=1e-5, rtol=1e-5)
    assert jnp.allclose(attn, attn_ref, atol=1e-5, rtol=1e-5)

    # Case 2: lane-dense batch tiling path (batch multiple of 128, 2 grid
    # steps, default EUP approximate reciprocal).  The looser tolerance only
    # accounts for the approximate reciprocal (~1e-3-level relative error);
    # structural bugs would produce O(0.1) errors.
    B2 = 256
    kq2, kk2, kv2 = jax.random.split(jax.random.PRNGKey(1), 3)
    Q2 = jax.random.normal(kq2, (B2, d_k, Sq), dtype=jnp.float32)
    K2 = jax.random.normal(kk2, (B2, d_k, Sk), dtype=jnp.float32)
    V2 = jax.random.normal(kv2, (B2, d_v, Sk), dtype=jnp.float32)

    context2, attn2 = scaled_dot_product_attention(Q2, K2, V2, d_k,
                                                   batch_tile=128)
    jax.block_until_ready((context2, attn2))
    ctx_ref2, attn_ref2 = _reference(Q2, K2, V2, d_k)
    assert context2.shape == (B2, Sq, d_v)
    assert attn2.shape == (B2, Sq, Sk)
    assert jnp.allclose(context2, ctx_ref2, atol=1e-2, rtol=1e-2)
    assert jnp.allclose(attn2, attn_ref2, atol=1e-2, rtol=1e-2)

    print("KERNEL_OK")
</pallas_src>

<mosaic_0001>
module attributes {stable_mosaic.version = 11 : i64} {
  func.func @kernel(%arg0: i32, %arg1: memref<4x8x2xf32, #tpu.memory_space<vmem>>, %arg2: memref<4x8x2xf32, #tpu.memory_space<vmem>>, %arg3: memref<4x8x2xf32, #tpu.memory_space<vmem>>, %arg4: memref<8x4x2xf32, #tpu.memory_space<vmem>>, %arg5: memref<8x8x2xf32, #tpu.memory_space<vmem>>) attributes {dimension_semantics = [#tpu.dimension_semantics<parallel>], iteration_bounds = array<i64: 1>, scalar_prefetch = 0 : i64, scratch_operands = 0 : i64, tpu.core_type = #tpu.core_type<tc>, window_params = [{transform_indices = @transform_0, window_bounds = array<i64: 4, 8, 2>}, {transform_indices = @transform_1, window_bounds = array<i64: 4, 8, 2>}, {transform_indices = @transform_2, window_bounds = array<i64: 4, 8, 2>}, {transform_indices = @transform_3, window_bounds = array<i64: 8, 4, 2>}, {transform_indices = @transform_4, window_bounds = array<i64: 8, 8, 2>}]} {
    %c0 = arith.constant 0 : index
    %c0_0 = arith.constant 0 : index
    %c0_1 = arith.constant 0 : index
    %0 = vector.load %arg1[%c0, %c0_0, %c0_1] : memref<4x8x2xf32, #tpu.memory_space<vmem>>, vector<4x8x2xf32>
    %c0_2 = arith.constant 0 : index
    %c0_3 = arith.constant 0 : index
    %c0_4 = arith.constant 0 : index
    %1 = vector.load %arg2[%c0_2, %c0_3, %c0_4] : memref<4x8x2xf32, #tpu.memory_space<vmem>>, vector<4x8x2xf32>
    %c0_5 = arith.constant 0 : index
    %c0_6 = arith.constant 0 : index
    %c0_7 = arith.constant 0 : index
    %2 = vector.load %arg3[%c0_5, %c0_6, %c0_7] : memref<4x8x2xf32, #tpu.memory_space<vmem>>, vector<4x8x2xf32>
    %3 = vector.extract_strided_slice %0 {offsets = [0, 0, 0], sizes = [1, 8, 2], strides = [1, 1, 1]} : vector<4x8x2xf32> to vector<1x8x2xf32>
    %4 = vector.shape_cast %3 : vector<1x8x2xf32> to vector<8x2xf32>
    %5 = vector.shape_cast %4 : vector<8x2xf32> to vector<8x1x2xf32>
    %6 = vector.extract_strided_slice %1 {offsets = [0, 0, 0], sizes = [1, 8, 2], strides = [1, 1, 1]} : vector<4x8x2xf32> to vector<1x8x2xf32>
    %7 = vector.shape_cast %6 : vector<1x8x2xf32> to vector<8x2xf32>
    %8 = vector.shape_cast %7 : vector<8x2xf32> to vector<1x8x2xf32>
    %9 = vector.broadcast %5 : vector<8x1x2xf32> to vector<8x8x2xf32>
    %10 = vector.broadcast %8 : vector<1x8x2xf32> to vector<8x8x2xf32>
    %11 = arith.mulf %9, %10 : vector<8x8x2xf32>
    %12 = vector.extract_strided_slice %0 {offsets = [1, 0, 0], sizes = [1, 8, 2], strides = [1, 1, 1]} : vector<4x8x2xf32> to vector<1x8x2xf32>
    %13 = vector.shape_cast %12 : vector<1x8x2xf32> to vector<8x2xf32>
    %14 = vector.shape_cast %13 : vector<8x2xf32> to vector<8x1x2xf32>
    %15 = vector.extract_strided_slice %1 {offsets = [1, 0, 0], sizes = [1, 8, 2], strides = [1, 1, 1]} : vector<4x8x2xf32> to vector<1x8x2xf32>
    %16 = vector.shape_cast %15 : vector<1x8x2xf32> to vector<8x2xf32>
    %17 = vector.shape_cast %16 : vector<8x2xf32> to vector<1x8x2xf32>
    %18 = vector.broadcast %14 : vector<8x1x2xf32> to vector<8x8x2xf32>
    %19 = vector.broadcast %17 : vector<1x8x2xf32> to vector<8x8x2xf32>
    %20 = arith.mulf %18, %19 : vector<8x8x2xf32>
    %21 = arith.addf %11, %20 : vector<8x8x2xf32>
    %22 = vector.extract_strided_slice %0 {offsets = [2, 0, 0], sizes = [1, 8, 2], strides = [1, 1, 1]} : vector<4x8x2xf32> to vector<1x8x2xf32>
    %23 = vector.shape_cast %22 : vector<1x8x2xf32> to vector<8x2xf32>
    %24 = vector.shape_cast %23 : vector<8x2xf32> to vector<8x1x2xf32>
    %25 = vector.extract_strided_slice %1 {offsets = [2, 0, 0], sizes = [1, 8, 2], strides = [1, 1, 1]} : vector<4x8x2xf32> to vector<1x8x2xf32>
    %26 = vector.shape_cast %25 : vector<1x8x2xf32> to vector<8x2xf32>
    %27 = vector.shape_cast %26 : vector<8x2xf32> to vector<1x8x2xf32>
    %28 = vector.broadcast %24 : vector<8x1x2xf32> to vector<8x8x2xf32>
    %29 = vector.broadcast %27 : vector<1x8x2xf32> to vector<8x8x2xf32>
    %30 = arith.mulf %28, %29 : vector<8x8x2xf32>
    %31 = arith.addf %21, %30 : vector<8x8x2xf32>
    %32 = vector.extract_strided_slice %0 {offsets = [3, 0, 0], sizes = [1, 8, 2], strides = [1, 1, 1]} : vector<4x8x2xf32> to vector<1x8x2xf32>
    %33 = vector.shape_cast %32 : vector<1x8x2xf32> to vector<8x2xf32>
    %34 = vector.shape_cast %33 : vector<8x2xf32> to vector<8x1x2xf32>
    %35 = vector.extract_strided_slice %1 {offsets = [3, 0, 0], sizes = [1, 8, 2], strides = [1, 1, 1]} : vector<4x8x2xf32> to vector<1x8x2xf32>
    %36 = vector.shape_cast %35 : vector<1x8x2xf32> to vector<8x2xf32>
    %37 = vector.shape_cast %36 : vector<8x2xf32> to vector<1x8x2xf32>
    %38 = vector.broadcast %34 : vector<8x1x2xf32> to vector<8x8x2xf32>
    %39 = vector.broadcast %37 : vector<1x8x2xf32> to vector<8x8x2xf32>
    %40 = arith.mulf %38, %39 : vector<8x8x2xf32>
    %41 = arith.addf %31, %40 : vector<8x8x2xf32>
    %cst = arith.constant 5.000000e-01 : f32
    %42 = vector.broadcast %cst : f32 to vector<8x8x2xf32>
    %43 = arith.mulf %41, %42 : vector<8x8x2xf32>
    %cst_8 = arith.constant dense<0xFF800000> : vector<8x2xf32>
    %44 = vector.multi_reduction <maximumf>, %43, %cst_8 [1] : vector<8x8x2xf32> to vector<8x2xf32>
    %45 = vector.shape_cast %44 : vector<8x2xf32> to vector<8x1x2xf32>
    %46 = vector.broadcast %45 : vector<8x1x2xf32> to vector<8x8x2xf32>
    %47 = arith.subf %43, %46 : vector<8x8x2xf32>
    %48 = math.exp %47 : vector<8x8x2xf32>
    %cst_9 = arith.constant dense<0.000000e+00> : vector<8x2xf32>
    %49 = vector.multi_reduction <add>, %48, %cst_9 [1] : vector<8x8x2xf32> to vector<8x2xf32>
    %50 = vector.shape_cast %49 : vector<8x2xf32> to vector<8x1x2xf32>
    %51 = tpu.reciprocal %50 : vector<8x1x2xf32> -> vector<8x1x2xf32>
    %52 = vector.broadcast %51 : vector<8x1x2xf32> to vector<8x8x2xf32>
    %53 = arith.mulf %48, %52 : vector<8x8x2xf32>
    %c0_10 = arith.constant 0 : index
    %c0_11 = arith.constant 0 : index
    %c0_12 = arith.constant 0 : index
    %54 = vector.load %arg5[%c0_10, %c0_11, %c0_12] : memref<8x8x2xf32, #tpu.memory_space<vmem>>, vector<8x8x2xf32>
    tpu.vector_store %arg5[%c0_10, %c0_11, %c0_12], %53 {strides = array<i32>} : memref<8x8x2xf32, #tpu.memory_space<vmem>>, vector<8x8x2xf32>,
    %55 = vector.extract_strided_slice %2 {offsets = [0, 0, 0], sizes = [1, 8, 2], strides = [1, 1, 1]} : vector<4x8x2xf32> to vector<1x8x2xf32>
    %56 = vector.shape_cast %55 : vector<1x8x2xf32> to vector<8x2xf32>
    %57 = vector.shape_cast %56 : vector<8x2xf32> to vector<1x8x2xf32>
    %58 = vector.broadcast %57 : vector<1x8x2xf32> to vector<8x8x2xf32>
    %59 = arith.mulf %53, %58 : vector<8x8x2xf32>
    %cst_13 = arith.constant dense<0.000000e+00> : vector<8x2xf32>
    %60 = vector.multi_reduction <add>, %59, %cst_13 [1] : vector<8x8x2xf32> to vector<8x2xf32>
    %61 = vector.extract_strided_slice %2 {offsets = [1, 0, 0], sizes = [1, 8, 2], strides = [1, 1, 1]} : vector<4x8x2xf32> to vector<1x8x2xf32>
    %62 = vector.shape_cast %61 : vector<1x8x2xf32> to vector<8x2xf32>
    %63 = vector.shape_cast %62 : vector<8x2xf32> to vector<1x8x2xf32>
    %64 = vector.broadcast %63 : vector<1x8x2xf32> to vector<8x8x2xf32>
    %65 = arith.mulf %53, %64 : vector<8x8x2xf32>
    %cst_14 = arith.constant dense<0.000000e+00> : vector<8x2xf32>
    %66 = vector.multi_reduction <add>, %65, %cst_14 [1] : vector<8x8x2xf32> to vector<8x2xf32>
    %67 = vector.extract_strided_slice %2 {offsets = [2, 0, 0], sizes = [1, 8, 2], strides = [1, 1, 1]} : vector<4x8x2xf32> to vector<1x8x2xf32>
    %68 = vector.shape_cast %67 : vector<1x8x2xf32> to vector<8x2xf32>
    %69 = vector.shape_cast %68 : vector<8x2xf32> to vector<1x8x2xf32>
    %70 = vector.broadcast %69 : vector<1x8x2xf32> to vector<8x8x2xf32>
    %71 = arith.mulf %53, %70 : vector<8x8x2xf32>
    %cst_15 = arith.constant dense<0.000000e+00> : vector<8x2xf32>
    %72 = vector.multi_reduction <add>, %71, %cst_15 [1] : vector<8x8x2xf32> to vector<8x2xf32>
    %73 = vector.extract_strided_slice %2 {offsets = [3, 0, 0], sizes = [1, 8, 2], strides = [1, 1, 1]} : vector<4x8x2xf32> to vector<1x8x2xf32>
    %74 = vector.shape_cast %73 : vector<1x8x2xf32> to vector<8x2xf32>
    %75 = vector.shape_cast %74 : vector<8x2xf32> to vector<1x8x2xf32>
    %76 = vector.broadcast %75 : vector<1x8x2xf32> to vector<8x8x2xf32>
    %77 = arith.mulf %53, %76 : vector<8x8x2xf32>
    %cst_16 = arith.constant dense<0.000000e+00> : vector<8x2xf32>
    %78 = vector.multi_reduction <add>, %77, %cst_16 [1] : vector<8x8x2xf32> to vector<8x2xf32>
    %79 = vector.shape_cast %60 : vector<8x2xf32> to vector<8x1x2xf32>
    %80 = vector.shape_cast %66 : vector<8x2xf32> to vector<8x1x2xf32>
    %81 = vector.shape_cast %72 : vector<8x2xf32> to vector<8x1x2xf32>
    %82 = vector.shape_cast %78 : vector<8x2xf32> to vector<8x1x2xf32>
    %83 = tpu.concatenate %79, %80, %81, %82 in 1 : vector<8x1x2xf32>, vector<8x1x2xf32>, vector<8x1x2xf32>, vector<8x1x2xf32> -> vector<8x4x2xf32>
    %c0_17 = arith.constant 0 : index
    %c0_18 = arith.constant 0 : index
    %c0_19 = arith.constant 0 : index
    %84 = vector.load %arg4[%c0_17, %c0_18, %c0_19] : memref<8x4x2xf32, #tpu.memory_space<vmem>>, vector<8x4x2xf32>
    tpu.vector_store %arg4[%c0_17, %c0_18, %c0_19], %83 {strides = array<i32>} : memref<8x4x2xf32, #tpu.memory_space<vmem>>, vector<8x4x2xf32>,
    return
  }
  func.func @transform_0(%arg0: i32) -> (i32, i32, i32) {
    %c0_i32 = arith.constant 0 : i32
    %c0_i32_0 = arith.constant 0 : i32
    %c0_i32_1 = arith.constant 0 : i32
    return %c0_i32, %c0_i32_0, %arg0 : i32, i32, i32
  }
  func.func @transform_1(%arg0: i32) -> (i32, i32, i32) {
    %c0_i32 = arith.constant 0 : i32
    %c0_i32_0 = arith.constant 0 : i32
    %c0_i32_1 = arith.constant 0 : i32
    return %c0_i32, %c0_i32_0, %arg0 : i32, i32, i32
  }
  func.func @transform_2(%arg0: i32) -> (i32, i32, i32) {
    %c0_i32 = arith.constant 0 : i32
    %c0_i32_0 = arith.constant 0 : i32
    %c0_i32_1 = arith.constant 0 : i32
    return %c0_i32, %c0_i32_0, %arg0 : i32, i32, i32
  }
  func.func @transform_3(%arg0: i32) -> (i32, i32, i32) {
    %c0_i32 = arith.constant 0 : i32
    %c0_i32_0 = arith.constant 0 : i32
    %c0_i32_1 = arith.constant 0 : i32
    return %c0_i32, %c0_i32_0, %arg0 : i32, i32, i32
  }
  func.func @transform_4(%arg0: i32) -> (i32, i32, i32) {
    %c0_i32 = arith.constant 0 : i32
    %c0_i32_0 = arith.constant 0 : i32
    %c0_i32_1 = arith.constant 0 : i32
    return %c0_i32, %c0_i32_0, %arg0 : i32, i32, i32
  }
}

</mosaic_0001>

<llo_original>
// kernel: tpu_custom_call.1
$region0: #{tpu_custom_call.1}
  #allocation0 [shape = 'u32[]', space=smem, size = 0x4, offset = 0x4, fixed_abs, tag = 'smem constant byte address 0x4 - core index']
  #allocation1 [shape = 'u32[144,128]{1,0:T(1,128)}', space=vmem, size = 0x12000, scoped, tag = 'internal scratch']
  %s0 = inlined_call_operand.vmem [shape: f32[4,8,2], index: 0, kind: input, shape index: {}]
  %s1 = inlined_call_operand.vmem [shape: f32[4,8,2], index: 1, kind: input, shape index: {}]
  %s2 = inlined_call_operand.vmem [shape: f32[4,8,2], index: 2, kind: input, shape index: {}]
  %s3 = inlined_call_operand.vmem [shape: f32[8,4,2], index: 3, kind: output, shape index: {0}]
  %s4 = inlined_call_operand.vmem [shape: f32[8,8,2], index: 4, kind: output, shape index: {1}]
  %5 = xla_tuple %s3, %s4
  %s6 = sld [smem:[#allocation0]]
  $region30: #{tpu_custom_call.1} parent=0
    _
  %s8 = ssub.s32 1, %s6
  %s9 = scalar_select 0, %s8, %s6
  // Predicated region
  $region2: #{tpu_custom_call.1} parent=0 // pred_check
    _
  $region3: #{tpu_custom_call.1} parent=0 // pred_check_branch
    %11 = sbr.rel (0) target = $region5
  $region4: #{tpu_custom_call.1} parent=0 // pred_region
    _
  $region5: #{tpu_custom_call.1} parent=0 // pred_fallthru
    _
  // Predicated region
  $region6: #{tpu_custom_call.1} parent=0 // pred_check
    _
  $region7: #{tpu_custom_call.1} parent=0 // pred_check_branch
    %13 = sbr.rel (0) target = $region9
  $region8: #{tpu_custom_call.1} parent=0 // pred_region
    _
  $region9: #{tpu_custom_call.1} parent=0 // pred_fallthru
    _
  // Predicated region
  $region10: #{tpu_custom_call.1} parent=0 // pred_check
    _
  $region11: #{tpu_custom_call.1} parent=0 // pred_check_branch
    %15 = sbr.rel (0) target = $region13
  $region12: #{tpu_custom_call.1} parent=0 // pred_region
    _
  $region13: #{tpu_custom_call.1} parent=0 // pred_fallthru
    _
  %v16 = vld [vmem:[%s0] sm:$0xff]
  %v17 = vld [vmem:[%s0 + $0x8] sm:$0xff]
  %v18 = vld [vmem:[%s0 + $0x10] sm:$0xff]
  %v19 = vld [vmem:[%s0 + $0x18] sm:$0xff]
  %v20 = vld [vmem:[%s1] sm:$0xff]
  %v21 = vld [vmem:[%s1 + $0x8] sm:$0xff]
  %v22 = vld [vmem:[%s1 + $0x10] sm:$0xff]
  %v23 = vld [vmem:[%s1 + $0x18] sm:$0xff]
  %v24 = vld [vmem:[%s2] sm:$0xff]
  %v25 = vld [vmem:[%s2 + $0x8] sm:$0xff]
  %v26 = vld [vmem:[%s2 + $0x10] sm:$0xff]
  %v27 = vld [vmem:[%s2 + $0x18] sm:$0xff]
  %v29 = vcombine.high %v16, %v16
  %v31 = vunpack.c.l.s4 1966171168
  %v32 = vunpack.c.0.s8 %v31
  %v33 = vlaneseq
  %v34 = vshrl.u32 %v33, 7
  %v35 = vsub.s32 %v32, %v34
  %v36 = vrot.slane %v16, %v35
  %v38 = vunpack.c.l.s4 1966171168
  %v39 = vunpack.c.0.s8 %v38
  %v40 = vlaneseq
  %v41 = vshrl.u32 %v40, 7
  %v42 = vsub.s32 %v39, %v41
  %v43 = vrot.slane %v29, %v42
  %v44 = vcombine.high %v36, %v36
  %v45 = vcombine.high %v43, %v43
  %v47 = vunpack.c.l.s4 1966171168
  %v48 = vunpack.c.0.s8 %v47
  %v49 = vlaneseq
  %v50 = vshrl.u32 %v49, 7
  %v51 = vsub.s32 %v48, %v50
  %v52 = vrot.slane %v36, %v51
  %v54 = vunpack.c.l.s4 1966171168
  %v55 = vunpack.c.0.s8 %v54
  %v56 = vlaneseq
  %v57 = vshrl.u32 %v56, 7
  %v58 = vsub.s32 %v55, %v57
  %v59 = vrot.slane %v43, %v58
  %v61 = vunpack.c.l.s4 1966171168
  %v62 = vunpack.c.0.s8 %v61
  %v63 = vlaneseq
  %v64 = vshrl.u32 %v63, 7
  %v65 = vsub.s32 %v62, %v64
  %v66 = vrot.slane %v44, %v65
  %v68 = vunpack.c.l.s4 1966171168
  %v69 = vunpack.c.0.s8 %v68
  %v70 = vlaneseq
  %v71 = vshrl.u32 %v70, 7
  %v72 = vsub.s32 %v69, %v71
  %v73 = vrot.slane %v45, %v72
  %v74 = vcombine.high %v52, %v52
  %v75 = vcombine.high %v59, %v59
  %v76 = vcombine.high %v66, %v66
  %v77 = vcombine.high %v73, %v73
  %v78 = vlaneseq
  %v79 = vshrl.u32 %v78, 7
  %v80 = vsub.s32 0, %v79
  %v81 = vrot.slane %v52, %v80
  %v82 = vlaneseq
  %v83 = vshrl.u32 %v82, 7
  %v84 = vsub.s32 0, %v83
  %v85 = vrot.slane %v66, %v84
  %v86 = vlaneseq
  %v87 = vshrl.u32 %v86, 7
  %v88 = vsub.s32 0, %v87
  %v89 = vrot.slane %v74, %v88
  %v90 = vlaneseq
  %v91 = vshrl.u32 %v90, 7
  %v92 = vsub.s32 0, %v91
  %v93 = vrot.slane %v76, %v92
  %v94 = vlaneseq
  %v95 = vshrl.u32 %v94, 7
  %v96 = vsub.s32 0, %v95
  %v97 = vrot.slane %v59, %v96
  %v98 = vlaneseq
  %v99 = vshrl.u32 %v98, 7
  %v100 = vsub.s32 0, %v99
  %v101 = vrot.slane %v73, %v100
  %v102 = vlaneseq
  %v103 = vshrl.u32 %v102, 7
  %v104 = vsub.s32 0, %v103
  %v105 = vrot.slane %v75, %v104
  %v106 = vlaneseq
  %v107 = vshrl.u32 %v106, 7
  %v108 = vsub.s32 0, %v107
  %v109 = vrot.slane %v77, %v108
  %v118 = vmul.f32 %v81, %v20
  %v119 = vmul.f32 %v85, %v20
  %v120 = vmul.f32 %v89, %v20
  %v121 = vmul.f32 %v93, %v20
  %v122 = vmul.f32 %v97, %v20
  %v123 = vmul.f32 %v101, %v20
  %v124 = vmul.f32 %v105, %v20
  %v125 = vmul.f32 %v109, %v20
  %v127 = vcombine.high %v17, %v17
  %v129 = vunpack.c.l.s4 1966171168
  %v130 = vunpack.c.0.s8 %v129
  %v131 = vlaneseq
  %v132 = vshrl.u32 %v131, 7
  %v133 = vsub.s32 %v130, %v132
  %v134 = vrot.slane %v17, %v133
  %v136 = vunpack.c.l.s4 1966171168
  %v137 = vunpack.c.0.s8 %v136
  %v138 = vlaneseq
  %v139 = vshrl.u32 %v138, 7
  %v140 = vsub.s32 %v137, %v139
  %v141 = vrot.slane %v127, %v140
  %v142 = vcombine.high %v134, %v134
  %v143 = vcombine.high %v141, %v141
  %v145 = vunpack.c.l.s4 1966171168
  %v146 = vunpack.c.0.s8 %v145
  %v147 = vlaneseq
  %v148 = vshrl.u32 %v147, 7
  %v149 = vsub.s32 %v146, %v148
  %v150 = vrot.slane %v134, %v149
  %v152 = vunpack.c.l.s4 1966171168
  %v153 = vunpack.c.0.s8 %v152
  %v154 = vlaneseq
  %v155 = vshrl.u32 %v154, 7
  %v156 = vsub.s32 %v153, %v155
  %v157 = vrot.slane %v141, %v156
  %v159 = vunpack.c.l.s4 1966171168
  %v160 = vunpack.c.0.s8 %v159
  %v161 = vlaneseq
  %v162 = vshrl.u32 %v161, 7
  %v163 = vsub.s32 %v160, %v162
  %v164 = vrot.slane %v142, %v163
  %v166 = vunpack.c.l.s4 1966171168
  %v167 = vunpack.c.0.s8 %v166
  %v168 = vlaneseq
  %v169 = vshrl.u32 %v168, 7
  %v170 = vsub.s32 %v167, %v169
  %v171 = vrot.slane %v143, %v170
  %v172 = vcombine.high %v150, %v150
  %v173 = vcombine.high %v157, %v157
  %v174 = vcombine.high %v164, %v164
  %v175 = vcombine.high %v171, %v171
  %v176 = vlaneseq
  %v177 = vshrl.u32 %v176, 7
  %v178 = vsub.s32 0, %v177
  %v179 = vrot.slane %v150, %v178
  %v180 = vlaneseq
  %v181 = vshrl.u32 %v180, 7
  %v182 = vsub.s32 0, %v181
  %v183 = vrot.slane %v164, %v182
  %v184 = vlaneseq
  %v185 = vshrl.u32 %v184, 7
  %v186 = vsub.s32 0, %v185
  %v187 = vrot.slane %v172, %v186
  %v188 = vlaneseq
  %v189 = vshrl.u32 %v188, 7
  %v190 = vsub.s32 0, %v189
  %v191 = vrot.slane %v174, %v190
  %v192 = vlaneseq
  %v193 = vshrl.u32 %v192, 7
  %v194 = vsub.s32 0, %v193
  %v195 = vrot.slane %v157, %v194
  %v196 = vlaneseq
  %v197 = vshrl.u32 %v196, 7
  %v198 = vsub.s32 0, %v197
  %v199 = vrot.slane %v171, %v198
  %v200 = vlaneseq
  %v201 = vshrl.u32 %v200, 7
  %v202 = vsub.s32 0, %v201
  %v203 = vrot.slane %v173, %v202
  %v204 = vlaneseq
  %v205 = vshrl.u32 %v204, 7
  %v206 = vsub.s32 0, %v205
  %v207 = vrot.slane %v175, %v206
  %v216 = vmul.f32 %v179, %v21
  %v217 = vmul.f32 %v183, %v21
  %v218 = vmul.f32 %v187, %v21
  %v219 = vmul.f32 %v191, %v21
  %v220 = vmul.f32 %v195, %v21
  %v221 = vmul.f32 %v199, %v21
  %v222 = vmul.f32 %v203, %v21
  %v223 = vmul.f32 %v207, %v21
  %v224 = vadd.f32 %v118, %v216
  %v225 = vadd.f32 %v119, %v217
  %v226 = vadd.f32 %v120, %v218
  %v227 = vadd.f32 %v121, %v219
  %v228 = vadd.f32 %v122, %v220
  %v229 = vadd.f32 %v123, %v221
  %v230 = vadd.f32 %v124, %v222
  %v231 = vadd.f32 %v125, %v223
  %v233 = vcombine.high %v18, %v18
  %v235 = vunpack.c.l.s4 1966171168
  %v236 = vunpack.c.0.s8 %v235
  %v237 = vlaneseq
  %v238 = vshrl.u32 %v237, 7
  %v239 = vsub.s32 %v236, %v238
  %v240 = vrot.slane %v18, %v239
  %v242 = vunpack.c.l.s4 1966171168
  %v243 = vunpack.c.0.s8 %v242
  %v244 = vlaneseq
  %v245 = vshrl.u32 %v244, 7
  %v246 = vsub.s32 %v243, %v245
  %v247 = vrot.slane %v233, %v246
  %v248 = vcombine.high %v240, %v240
  %v249 = vcombine.high %v247, %v247
  %v251 = vunpack.c.l.s4 1966171168
  %v252 = vunpack.c.0.s8 %v251
  %v253 = vlaneseq
  %v254 = vshrl.u32 %v253, 7
  %v255 = vsub.s32 %v252, %v254
  %v256 = vrot.slane %v240, %v255
  %v258 = vunpack.c.l.s4 1966171168
  %v259 = vunpack.c.0.s8 %v258
  %v260 = vlaneseq
  %v261 = vshrl.u32 %v260, 7
  %v262 = vsub.s32 %v259, %v261
  %v263 = vrot.slane %v247, %v262
  %v265 = vunpack.c.l.s4 1966171168
  %v266 = vunpack.c.0.s8 %v265
  %v267 = vlaneseq
  %v268 = vshrl.u32 %v267, 7
  %v269 = vsub.s32 %v266, %v268
  %v270 = vrot.slane %v248, %v269
  %v272 = vunpack.c.l.s4 1966171168
  %v273 = vunpack.c.0.s8 %v272
  %v274 = vlaneseq
  %v275 = vshrl.u32 %v274, 7
  %v276 = vsub.s32 %v273, %v275
  %v277 = vrot.slane %v249, %v276
  %v278 = vcombine.high %v256, %v256
  %v279 = vcombine.high %v263, %v263
  %v280 = vcombine.high %v270, %v270
  %v281 = vcombine.high %v277, %v277
  %v282 = vlaneseq
  %v283 = vshrl.u32 %v282, 7
  %v284 = vsub.s32 0, %v283
  %v285 = vrot.slane %v256, %v284
  %v286 = vlaneseq
  %v287 = vshrl.u32 %v286, 7
  %v288 = vsub.s32 0, %v287
  %v289 = vrot.slane %v270, %v288
  %v290 = vlaneseq
  %v291 = vshrl.u32 %v290, 7
  %v292 = vsub.s32 0, %v291
  %v293 = vrot.slane %v278, %v292
  %v294 = vlaneseq
  %v295 = vshrl.u32 %v294, 7
  %v296 = vsub.s32 0, %v295
  %v297 = vrot.slane %v280, %v296
  %v298 = vlaneseq
  %v299 = vshrl.u32 %v298, 7
  %v300 = vsub.s32 0, %v299
  %v301 = vrot.slane %v263, %v300
  %v302 = vlaneseq
  %v303 = vshrl.u32 %v302, 7
  %v304 = vsub.s32 0, %v303
  %v305 = vrot.slane %v277, %v304
  %v306 = vlaneseq
  %v307 = vshrl.u32 %v306, 7
  %v308 = vsub.s32 0, %v307
  %v309 = vrot.slane %v279, %v308
  %v310 = vlaneseq
  %v311 = vshrl.u32 %v310, 7
  %v312 = vsub.s32 0, %v311
  %v313 = vrot.slane %v281, %v312
  %v322 = vmul.f32 %v285, %v22
  %v323 = vmul.f32 %v289, %v22
  %v324 = vmul.f32 %v293, %v22
  %v325 = vmul.f32 %v297, %v22
  %v326 = vmul.f32 %v301, %v22
  %v327 = vmul.f32 %v305, %v22
  %v328 = vmul.f32 %v309, %v22
  %v329 = vmul.f32 %v313, %v22
  %v330 = vadd.f32 %v224, %v322
  %v331 = vadd.f32 %v225, %v323
  %v332 = vadd.f32 %v226, %v324
  %v333 = vadd.f32 %v227, %v325
  %v334 = vadd.f32 %v228, %v326
  %v335 = vadd.f32 %v229, %v327
  %v336 = vadd.f32 %v230, %v328
  %v337 = vadd.f32 %v231, %v329
  %v339 = vcombine.high %v19, %v19
  %v341 = vunpack.c.l.s4 1966171168
  %v342 = vunpack.c.0.s8 %v341
  %v343 = vlaneseq
  %v344 = vshrl.u32 %v343, 7
  %v345 = vsub.s32 %v342, %v344
  %v346 = vrot.slane %v19, %v345
  %v348 = vunpack.c.l.s4 1966171168
  %v349 = vunpack.c.0.s8 %v348
  %v350 = vlaneseq
  %v351 = vshrl.u32 %v350, 7
  %v352 = vsub.s32 %v349, %v351
  %v353 = vrot.slane %v339, %v352
  %v354 = vcombine.high %v346, %v346
  %v355 = vcombine.high %v353, %v353
  %v357 = vunpack.c.l.s4 1966171168
  %v358 = vunpack.c.0.s8 %v357
  %v359 = vlaneseq
  %v360 = vshrl.u32 %v359, 7
  %v361 = vsub.s32 %v358, %v360
  %v362 = vrot.slane %v346, %v361
  %v364 = vunpack.c.l.s4 1966171168
  %v365 = vunpack.c.0.s8 %v364
  %v366 = vlaneseq
  %v367 = vshrl.u32 %v366, 7
  %v368 = vsub.s32 %v365, %v367
  %v369 = vrot.slane %v353, %v368
  %v371 = vunpack.c.l.s4 1966171168
  %v372 = vunpack.c.0.s8 %v371
  %v373 = vlaneseq
  %v374 = vshrl.u32 %v373, 7
  %v375 = vsub.s32 %v372, %v374
  %v376 = vrot.slane %v354, %v375
  %v378 = vunpack.c.l.s4 1966171168
  %v379 = vunpack.c.0.s8 %v378
  %v380 = vlaneseq
  %v381 = vshrl.u32 %v380, 7
  %v382 = vsub.s32 %v379, %v381
  %v383 = vrot.slane %v355, %v382
  %v384 = vcombine.high %v362, %v362
  %v385 = vcombine.high %v369, %v369
  %v386 = vcombine.high %v376, %v376
  %v387 = vcombine.high %v383, %v383
  %v388 = vlaneseq
  %v389 = vshrl.u32 %v388, 7
  %v390 = vsub.s32 0, %v389
  %v391 = vrot.slane %v362, %v390
  %v392 = vlaneseq
  %v393 = vshrl.u32 %v392, 7
  %v394 = vsub.s32 0, %v393
  %v395 = vrot.slane %v376, %v394
  %v396 = vlaneseq
  %v397 = vshrl.u32 %v396, 7
  %v398 = vsub.s32 0, %v397
  %v399 = vrot.slane %v384, %v398
  %v400 = vlaneseq
  %v401 = vshrl.u32 %v400, 7
  %v402 = vsub.s32 0, %v401
  %v403 = vrot.slane %v386, %v402
  %v404 = vlaneseq
  %v405 = vshrl.u32 %v404, 7
  %v406 = vsub.s32 0, %v405
  %v407 = vrot.slane %v369, %v406
  %v408 = vlaneseq
  %v409 = vshrl.u32 %v408, 7
  %v410 = vsub.s32 0, %v409
  %v411 = vrot.slane %v383, %v410
  %v412 = vlaneseq
  %v413 = vshrl.u32 %v412, 7
  %v414 = vsub.s32 0, %v413
  %v415 = vrot.slane %v385, %v414
  %v416 = vlaneseq
  %v417 = vshrl.u32 %v416, 7
  %v418 = vsub.s32 0, %v417
  %v419 = vrot.slane %v387, %v418
  %v428 = vmul.f32 %v391, %v23
  %v429 = vmul.f32 %v395, %v23
  %v430 = vmul.f32 %v399, %v23
  %v431 = vmul.f32 %v403, %v23
  %v432 = vmul.f32 %v407, %v23
  %v433 = vmul.f32 %v411, %v23
  %v434 = vmul.f32 %v415, %v23
  %v435 = vmul.f32 %v419, %v23
  %v436 = vadd.f32 %v330, %v428
  %v437 = vadd.f32 %v331, %v429
  %v438 = vadd.f32 %v332, %v430
  %v439 = vadd.f32 %v333, %v431
  %v440 = vadd.f32 %v334, %v432
  %v441 = vadd.f32 %v335, %v433
  %v442 = vadd.f32 %v336, %v434
  %v443 = vadd.f32 %v337, %v435
  %v444 = vmul.f32 %v436, 0.5
  %v445 = vmul.f32 %v437, 0.5
  %v446 = vmul.f32 %v438, 0.5
  %v447 = vmul.f32 %v439, 0.5
  %v448 = vmul.f32 %v440, 0.5
  %v449 = vmul.f32 %v441, 0.5
  %v450 = vmul.f32 %v442, 0.5
  %v451 = vmul.f32 %v443, 0.5
  %vm452 = vcmask 15360
  %v453 = vsel %vm452, %v444, -inf
  %v454 = vrot.slane %v453, 4
  %v455 = vmax.f32 %v453, %v454
  %v456 = vrot.slane %v455, 2
  %v457 = vmax.f32 %v455, %v456
  %v458 = vrot.slane %v457, 1
  %v459 = vmax.f32 %v457, %v458
  %v460 = vsel %vm452, %v445, -inf
  %v461 = vrot.slane %v460, 4
  %v462 = vmax.f32 %v460, %v461
  %v463 = vrot.slane %v462, 2
  %v464 = vmax.f32 %v462, %v463
  %v465 = vrot.slane %v464, 1
  %v466 = vmax.f32 %v464, %v465
  %v467 = vsel %vm452, %v446, -inf
  %v468 = vrot.slane %v467, 4
  %v469 = vmax.f32 %v467, %v468
  %v470 = vrot.slane %v469, 2
  %v471 = vmax.f32 %v469, %v470
  %v472 = vrot.slane %v471, 1
  %v473 = vmax.f32 %v471, %v472
  %v474 = vsel %vm452, %v447, -inf
  %v475 = vrot.slane %v474, 4
  %v476 = vmax.f32 %v474, %v475
  %v477 = vrot.slane %v476, 2
  %v478 = vmax.f32 %v476, %v477
  %v479 = vrot.slane %v478, 1
  %v480 = vmax.f32 %v478, %v479
  %v481 = vsel %vm452, %v448, -inf
  %v482 = vrot.slane %v481, 4
  %v483 = vmax.f32 %v481, %v482
  %v484 = vrot.slane %v483, 2
  %v485 = vmax.f32 %v483, %v484
  %v486 = vrot.slane %v485, 1
  %v487 = vmax.f32 %v485, %v486
  %v488 = vsel %vm452, %v449, -inf
  %v489 = vrot.slane %v488, 4
  %v490 = vmax.f32 %v488, %v489
  %v491 = vrot.slane %v490, 2
  %v492 = vmax.f32 %v490, %v491
  %v493 = vrot.slane %v492, 1
  %v494 = vmax.f32 %v492, %v493
  %v495 = vsel %vm452, %v450, -inf
  %v496 = vrot.slane %v495, 4
  %v497 = vmax.f32 %v495, %v496
  %v498 = vrot.slane %v497, 2
  %v499 = vmax.f32 %v497, %v498
  %v500 = vrot.slane %v499, 1
  %v501 = vmax.f32 %v499, %v500
  %v502 = vsel %vm452, %v451, -inf
  %v503 = vrot.slane %v502, 4
  %v504 = vmax.f32 %v502, %v503
  %v505 = vrot.slane %v504, 2
  %v506 = vmax.f32 %v504, %v505
  %v507 = vrot.slane %v506, 1
  %v508 = vmax.f32 %v506, %v507
  %v509 = vsub.f32 %v444, %v459
  %v510 = vsub.f32 %v445, %v466
  %v511 = vsub.f32 %v446, %v473
  %v512 = vsub.f32 %v447, %v480
  %v513 = vsub.f32 %v448, %v487
  %v514 = vsub.f32 %v449, %v494
  %v515 = vsub.f32 %v450, %v501
  %v516 = vsub.f32 %v451, %v508
  %v517 = vmul.f32 %v509, 1.442695
  %v518 = vpow.pop %v517
  %v519 = vmul.f32 %v510, 1.442695
  %v520 = vpow.pop %v519
  %v521 = vmul.f32 %v511, 1.442695
  %v522 = vpow.pop %v521
  %v523 = vmul.f32 %v512, 1.442695
  %v524 = vpow.pop %v523
  %v525 = vmul.f32 %v513, 1.442695
  %v526 = vpow.pop %v525
  %v527 = vmul.f32 %v514, 1.442695
  %v528 = vpow.pop %v527
  %v529 = vmul.f32 %v515, 1.442695
  %v530 = vpow.pop %v529
  %v531 = vmul.f32 %v516, 1.442695
  %v532 = vpow.pop %v531
  %v533 = vsel %vm452, %v518, 0.0
  %v534 = vrot.slane %v533, 4
  %v535 = vadd.f32 %v533, %v534
  %v536 = vrot.slane %v535, 2
  %v537 = vadd.f32 %v535, %v536
  %v538 = vrot.slane %v537, 1
  %v539 = vadd.f32 %v537, %v538
  %v540 = vsel %vm452, %v520, 0.0
  %v541 = vrot.slane %v540, 4
  %v542 = vadd.f32 %v540, %v541
  %v543 = vrot.slane %v542, 2
  %v544 = vadd.f32 %v542, %v543
  %v545 = vrot.slane %v544, 1
  %v546 = vadd.f32 %v544, %v545
  %v547 = vsel %vm452, %v522, 0.0
  %v548 = vrot.slane %v547, 4
  %v549 = vadd.f32 %v547, %v548
  %v550 = vrot.slane %v549, 2
  %v551 = vadd.f32 %v549, %v550
  %v552 = vrot.slane %v551, 1
  %v553 = vadd.f32 %v551, %v552
  %v554 = vsel %vm452, %v524, 0.0
  %v555 = vrot.slane %v554, 4
  %v556 = vadd.f32 %v554, %v555
  %v557 = vrot.slane %v556, 2
  %v558 = vadd.f32 %v556, %v557
  %v559 = vrot.slane %v558, 1
  %v560 = vadd.f32 %v558, %v559
  %v561 = vsel %vm452, %v526, 0.0
  %v562 = vrot.slane %v561, 4
  %v563 = vadd.f32 %v561, %v562
  %v564 = vrot.slane %v563, 2
  %v565 = vadd.f32 %v563, %v564
  %v566 = vrot.slane %v565, 1
  %v567 = vadd.f32 %v565, %v566
  %v568 = vsel %vm452, %v528, 0.0
  %v569 = vrot.slane %v568, 4
  %v570 = vadd.f32 %v568, %v569
  %v571 = vrot.slane %v570, 2
  %v572 = vadd.f32 %v570, %v571
  %v573 = vrot.slane %v572, 1
  %v574 = vadd.f32 %v572, %v573
  %v575 = vsel %vm452, %v530, 0.0
  %v576 = vrot.slane %v575, 4
  %v577 = vadd.f32 %v575, %v576
  %v578 = vrot.slane %v577, 2
  %v579 = vadd.f32 %v577, %v578
  %v580 = vrot.slane %v579, 1
  %v581 = vadd.f32 %v579, %v580
  %v582 = vsel %vm452, %v532, 0.0
  %v583 = vrot.slane %v582, 4
  %v584 = vadd.f32 %v582, %v583
  %v585 = vrot.slane %v584, 2
  %v586 = vadd.f32 %v584, %v585
  %v587 = vrot.slane %v586, 1
  %v588 = vadd.f32 %v586, %v587
  %v589 = vrcp.pop %v539
  %v590 = vrcp.pop %v546
  %v591 = vrcp.pop %v553
  %v592 = vrcp.pop %v560
  %v593 = vrcp.pop %v567
  %v594 = vrcp.pop %v574
  %v595 = vrcp.pop %v581
  %v596 = vrcp.pop %v588
  %v597 = vmul.f32 %v518, %v589
  %v598 = vmul.f32 %v520, %v590
  %v599 = vmul.f32 %v522, %v591
  %v600 = vmul.f32 %v524, %v592
  %v601 = vmul.f32 %v526, %v593
  %v602 = vmul.f32 %v528, %v594
  %v603 = vmul.f32 %v530, %v595
  %v604 = vmul.f32 %v532, %v596
  %605 = vst.msk [vmem:[%s4] sm:$0xff] %vm452, %v597
  %606 = vst.msk [vmem:[%s4 + $0x8] sm:$0xff] %vm452, %v598
  %607 = vst.msk [vmem:[%s4 + $0x10] sm:$0xff] %vm452, %v599
  %608 = vst.msk [vmem:[%s4 + $0x18] sm:$0xff] %vm452, %v600
  %609 = vst.msk [vmem:[%s4 + $0x20] sm:$0xff] %vm452, %v601
  %610 = vst.msk [vmem:[%s4 + $0x28] sm:$0xff] %vm452, %v602
  %611 = vst.msk [vmem:[%s4 + $0x30] sm:$0xff] %vm452, %v603
  %612 = vst.msk [vmem:[%s4 + $0x38] sm:$0xff] %vm452, %v604
  %v613 = vmul.f32 %v597, %v24
  %v614 = vmul.f32 %v598, %v24
  %v615 = vmul.f32 %v599, %v24
  %v616 = vmul.f32 %v600, %v24
  %v617 = vmul.f32 %v601, %v24
  %v618 = vmul.f32 %v602, %v24
  %v619 = vmul.f32 %v603, %v24
  %v620 = vmul.f32 %v604, %v24
  %v621 = vsel %vm452, %v613, 0.0
  %v622 = vrot.slane %v621, 4
  %v623 = vadd.f32 %v621, %v622
  %v624 = vrot.slane %v623, 2
  %v625 = vadd.f32 %v623, %v624
  %v626 = vrot.slane %v625, 1
  %v627 = vadd.f32 %v625, %v626
  %v628 = vsel %vm452, %v614, 0.0
  %v629 = vrot.slane %v628, 4
  %v630 = vadd.f32 %v628, %v629
  %v631 = vrot.slane %v630, 2
  %v632 = vadd.f32 %v630, %v631
  %v633 = vrot.slane %v632, 1
  %v634 = vadd.f32 %v632, %v633
  %v635 = vsel %vm452, %v615, 0.0
  %v636 = vrot.slane %v635, 4
  %v637 = vadd.f32 %v635, %v636
  %v638 = vrot.slane %v637, 2
  %v639 = vadd.f32 %v637, %v638
  %v640 = vrot.slane %v639, 1
  %v641 = vadd.f32 %v639, %v640
  %v642 = vsel %vm452, %v616, 0.0
  %v643 = vrot.slane %v642, 4
  %v644 = vadd.f32 %v642, %v643
  %v645 = vrot.slane %v644, 2
  %v646 = vadd.f32 %v644, %v645
  %v647 = vrot.slane %v646, 1
  %v648 = vadd.f32 %v646, %v647
  %v649 = vsel %vm452, %v617, 0.0
  %v650 = vrot.slane %v649, 4
  %v651 = vadd.f32 %v649, %v650
  %v652 = vrot.slane %v651, 2
  %v653 = vadd.f32 %v651, %v652
  %v654 = vrot.slane %v653, 1
  %v655 = vadd.f32 %v653, %v654
  %v656 = vsel %vm452, %v618, 0.0
  %v657 = vrot.slane %v656, 4
  %v658 = vadd.f32 %v656, %v657
  %v659 = vrot.slane %v658, 2
  %v660 = vadd.f32 %v658, %v659
  %v661 = vrot.slane %v660, 1
  %v662 = vadd.f32 %v660, %v661
  %v663 = vsel %vm452, %v619, 0.0
  %v664 = vrot.slane %v663, 4
  %v665 = vadd.f32 %v663, %v664
  %v666 = vrot.slane %v665, 2
  %v667 = vadd.f32 %v665, %v666
  %v668 = vrot.slane %v667, 1
  %v669 = vadd.f32 %v667, %v668
  %v670 = vsel %vm452, %v620, 0.0
  %v671 = vrot.slane %v670, 4
  %v672 = vadd.f32 %v670, %v671
  %v673 = vrot.slane %v672, 2
  %v674 = vadd.f32 %v672, %v673
  %v675 = vrot.slane %v674, 1
  %v676 = vadd.f32 %v674, %v675
  %v677 = vmul.f32 %v597, %v25
  %v678 = vmul.f32 %v598, %v25
  %v679 = vmul.f32 %v599, %v25
  %v680 = vmul.f32 %v600, %v25
  %v681 = vmul.f32 %v601, %v25
  %v682 = vmul.f32 %v602, %v25
  %v683 = vmul.f32 %v603, %v25
  %v684 = vmul.f32 %v604, %v25
  %v685 = vsel %vm452, %v677, 0.0
  %v686 = vrot.slane %v685, 4
  %v687 = vadd.f32 %v685, %v686
  %v688 = vrot.slane %v687, 2
  %v689 = vadd.f32 %v687, %v688
  %v690 = vrot.slane %v689, 1
  %v691 = vadd.f32 %v689, %v690
  %v692 = vsel %vm452, %v678, 0.0
  %v693 = vrot.slane %v692, 4
  %v694 = vadd.f32 %v692, %v693
  %v695 = vrot.slane %v694, 2
  %v696 = vadd.f32 %v694, %v695
  %v697 = vrot.slane %v696, 1
  %v698 = vadd.f32 %v696, %v697
  %v699 = vsel %vm452, %v679, 0.0
  %v700 = vrot.slane %v699, 4
  %v701 = vadd.f32 %v699, %v700
  %v702 = vrot.slane %v701, 2
  %v703 = vadd.f32 %v701, %v702
  %v704 = vrot.slane %v703, 1
  %v705 = vadd.f32 %v703, %v704
  %v706 = vsel %vm452, %v680, 0.0
  %v707 = vrot.slane %v706, 4
  %v708 = vadd.f32 %v706, %v707
  %v709 = vrot.slane %v708, 2
  %v710 = vadd.f32 %v708, %v709
  %v711 = vrot.slane %v710, 1
  %v712 = vadd.f32 %v710, %v711
  %v713 = vsel %vm452, %v681, 0.0
  %v714 = vrot.slane %v713, 4
  %v715 = vadd.f32 %v713, %v714
  %v716 = vrot.slane %v715, 2
  %v717 = vadd.f32 %v715, %v716
  %v718 = vrot.slane %v717, 1
  %v719 = vadd.f32 %v717, %v718
  %v720 = vsel %vm452, %v682, 0.0
  %v721 = vrot.slane %v720, 4
  %v722 = vadd.f32 %v720, %v721
  %v723 = vrot.slane %v722, 2
  %v724 = vadd.f32 %v722, %v723
  %v725 = vrot.slane %v724, 1
  %v726 = vadd.f32 %v724, %v725
  %v727 = vsel %vm452, %v683, 0.0
  %v728 = vrot.slane %v727, 4
  %v729 = vadd.f32 %v727, %v728
  %v730 = vrot.slane %v729, 2
  %v731 = vadd.f32 %v729, %v730
  %v732 = vrot.slane %v731, 1
  %v733 = vadd.f32 %v731, %v732
  %v734 = vsel %vm452, %v684, 0.0
  %v735 = vrot.slane %v734, 4
  %v736 = vadd.f32 %v734, %v735
  %v737 = vrot.slane %v736, 2
  %v738 = vadd.f32 %v736, %v737
  %v739 = vrot.slane %v738, 1
  %v740 = vadd.f32 %v738, %v739
  %v741 = vmul.f32 %v597, %v26
  %v742 = vmul.f32 %v598, %v26
  %v743 = vmul.f32 %v599, %v26
  %v744 = vmul.f32 %v600, %v26
  %v745 = vmul.f32 %v601, %v26
  %v746 = vmul.f32 %v602, %v26
  %v747 = vmul.f32 %v603, %v26
  %v748 = vmul.f32 %v604, %v26
  %v749 = vsel %vm452, %v741, 0.0
  %v750 = vrot.slane %v749, 4
  %v751 = vadd.f32 %v749, %v750
  %v752 = vrot.slane %v751, 2
  %v753 = vadd.f32 %v751, %v752
  %v754 = vrot.slane %v753, 1
  %v755 = vadd.f32 %v753, %v754
  %v756 = vsel %vm452, %v742, 0.0
  %v757 = vrot.slane %v756, 4
  %v758 = vadd.f32 %v756, %v757
  %v759 = vrot.slane %v758, 2
  %v760 = vadd.f32 %v758, %v759
  %v761 = vrot.slane %v760, 1
  %v762 = vadd.f32 %v760, %v761
  %v763 = vsel %vm452, %v743, 0.0
  %v764 = vrot.slane %v763, 4
  %v765 = vadd.f32 %v763, %v764
  %v766 = vrot.slane %v765, 2
  %v767 = vadd.f32 %v765, %v766
  %v768 = vrot.slane %v767, 1
  %v769 = vadd.f32 %v767, %v768
  %v770 = vsel %vm452, %v744, 0.0
  %v771 = vrot.slane %v770, 4
  %v772 = vadd.f32 %v770, %v771
  %v773 = vrot.slane %v772, 2
  %v774 = vadd.f32 %v772, %v773
  %v775 = vrot.slane %v774, 1
  %v776 = vadd.f32 %v774, %v775
  %v777 = vsel %vm452, %v745, 0.0
  %v778 = vrot.slane %v777, 4
  %v779 = vadd.f32 %v777, %v778
  %v780 = vrot.slane %v779, 2
  %v781 = vadd.f32 %v779, %v780
  %v782 = vrot.slane %v781, 1
  %v783 = vadd.f32 %v781, %v782
  %v784 = vsel %vm452, %v746, 0.0
  %v785 = vrot.slane %v784, 4
  %v786 = vadd.f32 %v784, %v785
  %v787 = vrot.slane %v786, 2
  %v788 = vadd.f32 %v786, %v787
  %v789 = vrot.slane %v788, 1
  %v790 = vadd.f32 %v788, %v789
  %v791 = vsel %vm452, %v747, 0.0
  %v792 = vrot.slane %v791, 4
  %v793 = vadd.f32 %v791, %v792
  %v794 = vrot.slane %v793, 2
  %v795 = vadd.f32 %v793, %v794
  %v796 = vrot.slane %v795, 1
  %v797 = vadd.f32 %v795, %v796
  %v798 = vsel %vm452, %v748, 0.0
  %v799 = vrot.slane %v798, 4
  %v800 = vadd.f32 %v798, %v799
  %v801 = vrot.slane %v800, 2
  %v802 = vadd.f32 %v800, %v801
  %v803 = vrot.slane %v802, 1
  %v804 = vadd.f32 %v802, %v803
  %v805 = vmul.f32 %v597, %v27
  %v806 = vmul.f32 %v598, %v27
  %v807 = vmul.f32 %v599, %v27
  %v808 = vmul.f32 %v600, %v27
  %v809 = vmul.f32 %v601, %v27
  %v810 = vmul.f32 %v602, %v27
  %v811 = vmul.f32 %v603, %v27
  %v812 = vmul.f32 %v604, %v27
  %v813 = vsel %vm452, %v805, 0.0
  %v814 = vrot.slane %v813, 4
  %v815 = vadd.f32 %v813, %v814
  %v816 = vrot.slane %v815, 2
  %v817 = vadd.f32 %v815, %v816
  %v818 = vrot.slane %v817, 1
  %v819 = vadd.f32 %v817, %v818
  %v820 = vsel %vm452, %v806, 0.0
  %v821 = vrot.slane %v820, 4
  %v822 = vadd.f32 %v820, %v821
  %v823 = vrot.slane %v822, 2
  %v824 = vadd.f32 %v822, %v823
  %v825 = vrot.slane %v824, 1
  %v826 = vadd.f32 %v824, %v825
  %v827 = vsel %vm452, %v807, 0.0
  %v828 = vrot.slane %v827, 4
  %v829 = vadd.f32 %v827, %v828
  %v830 = vrot.slane %v829, 2
  %v831 = vadd.f32 %v829, %v830
  %v832 = vrot.slane %v831, 1
  %v833 = vadd.f32 %v831, %v832
  %v834 = vsel %vm452, %v808, 0.0
  %v835 = vrot.slane %v834, 4
  %v836 = vadd.f32 %v834, %v835
  %v837 = vrot.slane %v836, 2
  %v838 = vadd.f32 %v836, %v837
  %v839 = vrot.slane %v838, 1
  %v840 = vadd.f32 %v838, %v839
  %v841 = vsel %vm452, %v809, 0.0
  %v842 = vrot.slane %v841, 4
  %v843 = vadd.f32 %v841, %v842
  %v844 = vrot.slane %v843, 2
  %v845 = vadd.f32 %v843, %v844
  %v846 = vrot.slane %v845, 1
  %v847 = vadd.f32 %v845, %v846
  %v848 = vsel %vm452, %v810, 0.0
  %v849 = vrot.slane %v848, 4
  %v850 = vadd.f32 %v848, %v849
  %v851 = vrot.slane %v850, 2
  %v852 = vadd.f32 %v850, %v851
  %v853 = vrot.slane %v852, 1
  %v854 = vadd.f32 %v852, %v853
  %v855 = vsel %vm452, %v811, 0.0
  %v856 = vrot.slane %v855, 4
  %v857 = vadd.f32 %v855, %v856
  %v858 = vrot.slane %v857, 2
  %v859 = vadd.f32 %v857, %v858
  %v860 = vrot.slane %v859, 1
  %v861 = vadd.f32 %v859, %v860
  %v862 = vsel %vm452, %v812, 0.0
  %v863 = vrot.slane %v862, 4
  %v864 = vadd.f32 %v862, %v863
  %v865 = vrot.slane %v864, 2
  %v866 = vadd.f32 %v864, %v865
  %v867 = vrot.slane %v866, 1
  %v868 = vadd.f32 %v866, %v867
  %vm869 = vcmask 1040384
  %v870 = vsel %vm869, %v627, %v691
  %v871 = vsel %vm869, %v634, %v698
  %v872 = vsel %vm869, %v641, %v705
  %v873 = vsel %vm869, %v648, %v712
  %v874 = vsel %vm869, %v655, %v719
  %v875 = vsel %vm869, %v662, %v726
  %v876 = vsel %vm869, %v669, %v733
  %v877 = vsel %vm869, %v676, %v740
  %vm878 = vcmask 1041408
  %v879 = vsel %vm878, %v870, %v755
  %v880 = vsel %vm878, %v871, %v762
  %v881 = vsel %vm878, %v872, %v769
  %v882 = vsel %vm878, %v873, %v776
  %v883 = vsel %vm878, %v874, %v783
  %v884 = vsel %vm878, %v875, %v790
  %v885 = vsel %vm878, %v876, %v797
  %v886 = vsel %vm878, %v877, %v804
  %vm887 = vcmask 1042432
  %v888 = vsel %vm887, %v879, %v819
  %v889 = vsel %vm887, %v880, %v826
  %v890 = vsel %vm887, %v881, %v833
  %v891 = vsel %vm887, %v882, %v840
  %v892 = vsel %vm887, %v883, %v847
  %v893 = vsel %vm887, %v884, %v854
  %v894 = vsel %vm887, %v885, %v861
  %v895 = vsel %vm887, %v886, %v868
  %vm896 = vcmask 11264
  %897 = vst.msk [vmem:[%s3] sm:$0xf] %vm896, %v888
  %898 = vst.msk [vmem:[%s3 + $0x4] sm:$0xf] %vm896, %v889
  %899 = vst.msk [vmem:[%s3 + $0x8] sm:$0xf] %vm896, %v890
  %900 = vst.msk [vmem:[%s3 + $0xc] sm:$0xf] %vm896, %v891
  %901 = vst.msk [vmem:[%s3 + $0x10] sm:$0xf] %vm896, %v892
  %902 = vst.msk [vmem:[%s3 + $0x14] sm:$0xf] %vm896, %v893
  %903 = vst.msk [vmem:[%s3 + $0x18] sm:$0xf] %vm896, %v894
  %904 = vst.msk [vmem:[%s3 + $0x1c] sm:$0xf] %vm896, %v895
  // Predicated region
  $region14: #{tpu_custom_call.1} parent=0 // pred_check
    _
  $region15: #{tpu_custom_call.1} parent=0 // pred_check_branch
    %906 = sbr.rel (0) target = $region17
  $region16: #{tpu_custom_call.1} parent=0 // pred_region
    _
  $region17: #{tpu_custom_call.1} parent=0 // pred_fallthru
    _
  // Predicated region
  $region18: #{tpu_custom_call.1} parent=0 // pred_check
    _
  $region19: #{tpu_custom_call.1} parent=0 // pred_check_branch
    %908 = sbr.rel (0) target = $region21
  $region20: #{tpu_custom_call.1} parent=0 // pred_region
    _
  $region21: #{tpu_custom_call.1} parent=0 // pred_fallthru
    _
  // Predicated region
  $region22: #{tpu_custom_call.1} parent=0 // pred_check
    _
  $region23: #{tpu_custom_call.1} parent=0 // pred_check_branch
    %910 = sbr.rel (0) target = $region25
  $region24: #{tpu_custom_call.1} parent=0 // pred_region
    _
  $region25: #{tpu_custom_call.1} parent=0 // pred_fallthru
    _
  // Predicated region
  $region26: #{tpu_custom_call.1} parent=0 // pred_check
    _
  $region27: #{tpu_custom_call.1} parent=0 // pred_check_branch
    %912 = sbr.rel (0) target = $region29
  $region28: #{tpu_custom_call.1} parent=0 // pred_region
    _
  $region29: #{tpu_custom_call.1} parent=0 // pred_fallthru
    _

</llo_original>
